<compile_context>
chip_gen: v6e
topology: v6e:2x2x1
jax: 0.10.0
libtpu: 0.0.40
codegen_flags: <defaults>
</compile_context>

<pallas_src>
import jax
import jax.numpy as jnp
from jax.experimental import pallas as pl
from jax.experimental.pallas import tpu as pltpu

HEADS_PAD = 128  # fused value+policy(+dup policy) head padded to one lane width


def _round_up(x, m):
    return ((x + m - 1) // m) * m


def ffn_kernel(x_ref, w1_ref, b1_ref, wh_ref, bh_ref, smask_ref, pmask_ref, out_ref):
    # hidden = relu(x @ W1 + b1): bf16 MXU matmul, f32 accumulate + epilogue.
    h = jnp.dot(x_ref[...], w1_ref[...], preferred_element_type=jnp.float32)
    h = jnp.maximum(h + b1_ref[...], 0.0)

    # Fused heads, one MXU pass over a (H, 128) bf16 weight:
    #   col 0            -> value
    #   cols [1, 1+A)    -> policy logits
    #   cols [1+A, 1+2A) -> policy logits (duplicate -> becomes log-probs below)
    #   rest             -> zero padding
    head = jnp.dot(h.astype(wh_ref.dtype), wh_ref[...],
                   preferred_element_type=jnp.float32)
    head = head + bh_ref[...]

    # log-sum-exp over the real action columns only: precomputed additive mask
    # (0.0 on action cols, -1e30 elsewhere) -> a single VPU add, no iota/select.
    masked = head + smask_ref[...]
    m = jnp.max(masked, axis=-1, keepdims=True)
    lse = m + jnp.log(jnp.sum(jnp.exp(masked - m), axis=-1, keepdims=True))

    # Single lane-dense 128-wide output slab per row:
    #   [ value | logits(A) | log_probs(A) | pad ]
    # pmask is 1.0 on cols >= 1+A, so the duplicated-logit columns turn into
    # head - lse = log_softmax; the first 1+A columns pass through untouched.
    out_ref[...] = head - lse * pmask_ref[...]


def ffn_forward(state, w1, b1, wv, bv, wp, bp, *, block_b=None):
    B, S = state.shape
    H = w1.shape[1]
    A = wp.shape[1]
    heads = 1 + A
    assert A >= 1, "need at least one action"
    assert 1 + 2 * A <= HEADS_PAD, "action space must fit twice in one lane block"

    f32, bf16 = jnp.float32, jnp.bfloat16

    # Fused head weight/bias; policy columns duplicated at [1+A, 1+2A).
    wh = (jnp.zeros((H, HEADS_PAD), f32)
          .at[:, 0:1].set(wv.astype(f32))
          .at[:, 1:heads].set(wp.astype(f32))
          .at[:, heads:heads + A].set(wp.astype(f32)))
    bh = (jnp.zeros((1, HEADS_PAD), f32)
          .at[:, 0:1].set(bv.astype(f32))
          .at[:, 1:heads].set(bp.astype(f32))
          .at[:, heads:heads + A].set(bp.astype(f32)))

    # Precomputed masks (replace in-kernel iota/compare/where).
    col = jnp.arange(HEADS_PAD)
    smask = jnp.where((col >= 1) & (col < heads), 0.0, -1e30).astype(f32)[None, :]
    pmask = (col >= heads).astype(f32)[None, :]

    # Batch tiling. Big tiles amortize the ~0.35us/step grid overhead (no MXU-M
    # cap); for large B use >=2 tiles so the "parallel" axis can use both v7x
    # TensorCores. 16-row alignment keeps bf16 sublane packing natural.
    if block_b is None:
        if B <= 64:
            block_b = _round_up(B, 16)          # single tile; launch-bound anyway
        else:
            block_b = min(512, _round_up(pl.cdiv(B, 2), 16))
    assert block_b % 8 == 0, "block_b must be a multiple of 8"
    Bp = _round_up(B, block_b)

    x = state.astype(f32)
    if Bp != B:
        x = jnp.pad(x, ((0, Bp - B), (0, 0)))
    x = x.astype(bf16)

    grid = (Bp // block_b,)

    out = pl.pallas_call(
        ffn_kernel,
        out_shape=jax.ShapeDtypeStruct((Bp, HEADS_PAD), f32),
        grid=grid,
        in_specs=[
            pl.BlockSpec((block_b, S), lambda i: (i, 0)),      # state tile (pipelined)
            pl.BlockSpec((S, H), lambda i: (0, 0)),            # W1 (resident, bf16)
            pl.BlockSpec((1, H), lambda i: (0, 0)),            # b1 (f32)
            pl.BlockSpec((H, HEADS_PAD), lambda i: (0, 0)),    # fused head weight (bf16)
            pl.BlockSpec((1, HEADS_PAD), lambda i: (0, 0)),    # fused head bias (f32)
            pl.BlockSpec((1, HEADS_PAD), lambda i: (0, 0)),    # additive softmax mask
            pl.BlockSpec((1, HEADS_PAD), lambda i: (0, 0)),    # pack mask
        ],
        out_specs=pl.BlockSpec((block_b, HEADS_PAD), lambda i: (i, 0)),
        compiler_params=pltpu.CompilerParams(
            # batch axis is independent -> shard across TCs on v7x
            dimension_semantics=("parallel",),
            # headroom beyond v5e's 16 MiB scoped default; within v7x 64 MiB
            vmem_limit_bytes=32 * 1024 * 1024,
        ),
        cost_estimate=pl.CostEstimate(
            flops=2 * Bp * (S * H + H * HEADS_PAD),
            transcendentals=Bp * (HEADS_PAD + 1),
            bytes_accessed=(2 * Bp * S + 2 * S * H + 4 * H + 2 * H * HEADS_PAD
                            + 3 * 4 * HEADS_PAD + 4 * Bp * HEADS_PAD),
        ),
    )(x, w1.astype(bf16), b1.astype(f32), wh.astype(bf16), bh, smask, pmask)

    value = out[:B, 0:1]
    logits = out[:B, 1:heads]
    log_probs = out[:B, heads:heads + A]
    # TODO(synk): torch.distributions.Categorical object itself has no Pallas
    # equivalent; it is fully determined by (logits, log_probs) returned here.
    return value, logits, log_probs


if __name__ == "__main__":
    # model_config: state_space_size=16, mid_dim=32, action_space_size=8
    B, S, H, A = 8, 16, 32, 8

    key = jax.random.PRNGKey(0)
    ks = jax.random.split(key, 8)

    # _reset_parameters(): normal_(p, 0.0, 0.1) on every parameter
    state = jax.random.normal(ks[0], (B, S), dtype=jnp.float32)
    w1 = 0.1 * jax.random.normal(ks[1], (S, H), dtype=jnp.float32)
    b1 = 0.1 * jax.random.normal(ks[2], (1, H), dtype=jnp.float32)
    wv = 0.1 * jax.random.normal(ks[3], (H, 1), dtype=jnp.float32)
    bv = 0.1 * jax.random.normal(ks[4], (1, 1), dtype=jnp.float32)
    wp = 0.1 * jax.random.normal(ks[5], (H, A), dtype=jnp.float32)
    bp = 0.1 * jax.random.normal(ks[6], (1, A), dtype=jnp.float32)

    value, logits, log_probs = ffn_forward(state, w1, b1, wv, bv, wp, bp)
    jax.block_until_ready((value, logits, log_probs))

    # pure-JAX f32 reference check (bf16 MXU inputs -> relaxed tolerance)
    h_ref = jnp.maximum(state @ w1 + b1, 0.0)
    v_ref = h_ref @ wv + bv
    l_ref = h_ref @ wp + bp
    lp_ref = jax.nn.log_softmax(l_ref, axis=-1)
    assert value.shape == (B, 1) and logits.shape == (B, A) and log_probs.shape == (B, A)
    assert jnp.allclose(value, v_ref, atol=2e-2)
    assert jnp.allclose(logits, l_ref, atol=2e-2)
    assert jnp.allclose(log_probs, lp_ref, atol=2e-2)

    print("KERNEL_OK")
</pallas_src>

<mosaic_0001>
module attributes {stable_mosaic.version = 11 : i64} {
  func.func @ffn_kernel(%arg0: i32, %arg1: memref<16x16xbf16, #tpu.memory_space<vmem>>, %arg2: memref<16x32xbf16, #tpu.memory_space<vmem>>, %arg3: memref<1x32xf32, #tpu.memory_space<vmem>>, %arg4: memref<32x128xbf16, #tpu.memory_space<vmem>>, %arg5: memref<1x128xf32, #tpu.memory_space<vmem>>, %arg6: memref<1x128xf32, #tpu.memory_space<vmem>>, %arg7: memref<1x128xf32, #tpu.memory_space<vmem>>, %arg8: memref<16x128xf32, #tpu.memory_space<vmem>>) attributes {dimension_semantics = [#tpu.dimension_semantics<parallel>], iteration_bounds = array<i64: 1>, scalar_prefetch = 0 : i64, scratch_operands = 0 : i64, tpu.core_type = #tpu.core_type<tc>, window_params = [{transform_indices = @transform_0, window_bounds = array<i64: 16, 16>}, {pipeline_mode = #tpu.pipeline_mode<synchronous>, transform_indices = @transform_1, window_bounds = array<i64: 16, 32>}, {pipeline_mode = #tpu.pipeline_mode<synchronous>, transform_indices = @transform_2, window_bounds = array<i64: 1, 32>}, {pipeline_mode = #tpu.pipeline_mode<synchronous>, transform_indices = @transform_3, window_bounds = array<i64: 32, 128>}, {pipeline_mode = #tpu.pipeline_mode<synchronous>, transform_indices = @transform_4, window_bounds = array<i64: 1, 128>}, {pipeline_mode = #tpu.pipeline_mode<synchronous>, transform_indices = @transform_5, window_bounds = array<i64: 1, 128>}, {pipeline_mode = #tpu.pipeline_mode<synchronous>, transform_indices = @transform_6, window_bounds = array<i64: 1, 128>}, {transform_indices = @transform_7, window_bounds = array<i64: 16, 128>}]} {
    %c0 = arith.constant 0 : index
    %c0_0 = arith.constant 0 : index
    %0 = vector.load %arg1[%c0, %c0_0] : memref<16x16xbf16, #tpu.memory_space<vmem>>, vector<16x16xbf16>
    %c0_1 = arith.constant 0 : index
    %c0_2 = arith.constant 0 : index
    %1 = vector.load %arg2[%c0_1, %c0_2] : memref<16x32xbf16, #tpu.memory_space<vmem>>, vector<16x32xbf16>
    %cst = arith.constant dense<0.000000e+00> : vector<16x32xf32>
    %2 = tpu.matmul %0, %1, %cst {dimension_numbers = #tpu.dot_dimension_numbers<[1], [0], [0], [1], [0, 0, 1, 1], [], []>} : vector<16x16xbf16>, vector<16x32xbf16>, vector<16x32xf32> -> vector<16x32xf32>
    %c0_3 = arith.constant 0 : index
    %c0_4 = arith.constant 0 : index
    %3 = vector.load %arg3[%c0_3, %c0_4] : memref<1x32xf32, #tpu.memory_space<vmem>>, vector<1x32xf32>
    %4 = vector.broadcast %3 : vector<1x32xf32> to vector<16x32xf32>
    %5 = arith.addf %2, %4 : vector<16x32xf32>
    %cst_5 = arith.constant 0.000000e+00 : f32
    %6 = vector.broadcast %cst_5 : f32 to vector<16x32xf32>
    %7 = arith.maximumf %5, %6 : vector<16x32xf32>
    %8 = arith.truncf %7 : vector<16x32xf32> to vector<16x32xbf16>
    %c0_6 = arith.constant 0 : index
    %c0_7 = arith.constant 0 : index
    %9 = vector.load %arg4[%c0_6, %c0_7] : memref<32x128xbf16, #tpu.memory_space<vmem>>, vector<32x128xbf16>
    %cst_8 = arith.constant dense<0.000000e+00> : vector<16x128xf32>
    %10 = tpu.matmul %8, %9, %cst_8 {dimension_numbers = #tpu.dot_dimension_numbers<[1], [0], [0], [1], [0, 0, 1, 1], [], []>} : vector<16x32xbf16>, vector<32x128xbf16>, vector<16x128xf32> -> vector<16x128xf32>
    %c0_9 = arith.constant 0 : index
    %c0_10 = arith.constant 0 : index
    %11 = vector.load %arg5[%c0_9, %c0_10] : memref<1x128xf32, #tpu.memory_space<vmem>>, vector<1x128xf32>
    %12 = vector.broadcast %11 : vector<1x128xf32> to vector<16x128xf32>
    %13 = arith.addf %10, %12 : vector<16x128xf32>
    %c0_11 = arith.constant 0 : index
    %c0_12 = arith.constant 0 : index
    %14 = vector.load %arg6[%c0_11, %c0_12] : memref<1x128xf32, #tpu.memory_space<vmem>>, vector<1x128xf32>
    %15 = vector.broadcast %14 : vector<1x128xf32> to vector<16x128xf32>
    %16 = arith.addf %13, %15 : vector<16x128xf32>
    %cst_13 = arith.constant dense<0xFF800000> : vector<16xf32>
    %17 = vector.multi_reduction <maximumf>, %16, %cst_13 [1] : vector<16x128xf32> to vector<16xf32>
    %18 = vector.shape_cast %17 : vector<16xf32> to vector<16x1xf32>
    %19 = vector.broadcast %18 : vector<16x1xf32> to vector<16x128xf32>
    %20 = arith.subf %16, %19 : vector<16x128xf32>
    %21 = math.exp %20 : vector<16x128xf32>
    %cst_14 = arith.constant dense<0.000000e+00> : vector<16xf32>
    %22 = vector.multi_reduction <add>, %21, %cst_14 [1] : vector<16x128xf32> to vector<16xf32>
    %23 = vector.shape_cast %22 : vector<16xf32> to vector<16x1xf32>
    %24 = math.log %23 : vector<16x1xf32>
    %25 = arith.addf %18, %24 : vector<16x1xf32>
    %c0_15 = arith.constant 0 : index
    %c0_16 = arith.constant 0 : index
    %26 = vector.load %arg7[%c0_15, %c0_16] : memref<1x128xf32, #tpu.memory_space<vmem>>, vector<1x128xf32>
    %27 = vector.broadcast %25 : vector<16x1xf32> to vector<16x128xf32>
    %28 = vector.broadcast %26 : vector<1x128xf32> to vector<16x128xf32>
    %29 = arith.mulf %27, %28 : vector<16x128xf32>
    %30 = arith.subf %13, %29 : vector<16x128xf32>
    %c0_17 = arith.constant 0 : index
    %c0_18 = arith.constant 0 : index
    %31 = vector.load %arg8[%c0_17, %c0_18] : memref<16x128xf32, #tpu.memory_space<vmem>>, vector<16x128xf32>
    tpu.vector_store %arg8[%c0_17, %c0_18], %30 {strides = array<i32>} : memref<16x128xf32, #tpu.memory_space<vmem>>, vector<16x128xf32>,
    return
  }
  func.func @transform_0(%arg0: i32) -> (i32, i32) {
    %c0_i32 = arith.constant 0 : i32
    %c0_i32_0 = arith.constant 0 : i32
    return %arg0, %c0_i32 : i32, i32
  }
  func.func @transform_1(%arg0: i32) -> (i32, i32) {
    %c0_i32 = arith.constant 0 : i32
    %c0_i32_0 = arith.constant 0 : i32
    %c0_i32_1 = arith.constant 0 : i32
    return %c0_i32, %c0_i32_0 : i32, i32
  }
  func.func @transform_2(%arg0: i32) -> (i32, i32) {
    %c0_i32 = arith.constant 0 : i32
    %c0_i32_0 = arith.constant 0 : i32
    %c0_i32_1 = arith.constant 0 : i32
    return %c0_i32, %c0_i32_0 : i32, i32
  }
  func.func @transform_3(%arg0: i32) -> (i32, i32) {
    %c0_i32 = arith.constant 0 : i32
    %c0_i32_0 = arith.constant 0 : i32
    %c0_i32_1 = arith.constant 0 : i32
    return %c0_i32, %c0_i32_0 : i32, i32
  }
  func.func @transform_4(%arg0: i32) -> (i32, i32) {
    %c0_i32 = arith.constant 0 : i32
    %c0_i32_0 = arith.constant 0 : i32
    %c0_i32_1 = arith.constant 0 : i32
    return %c0_i32, %c0_i32_0 : i32, i32
  }
  func.func @transform_5(%arg0: i32) -> (i32, i32) {
    %c0_i32 = arith.constant 0 : i32
    %c0_i32_0 = arith.constant 0 : i32
    %c0_i32_1 = arith.constant 0 : i32
    return %c0_i32, %c0_i32_0 : i32, i32
  }
  func.func @transform_6(%arg0: i32) -> (i32, i32) {
    %c0_i32 = arith.constant 0 : i32
    %c0_i32_0 = arith.constant 0 : i32
    %c0_i32_1 = arith.constant 0 : i32
    return %c0_i32, %c0_i32_0 : i32, i32
  }
  func.func @transform_7(%arg0: i32) -> (i32, i32) {
    %c0_i32 = arith.constant 0 : i32
    %c0_i32_0 = arith.constant 0 : i32
    return %arg0, %c0_i32 : i32, i32
  }
}

</mosaic_0001>

<llo_original>
// kernel: tpu_custom_call.1
$region0: #{tpu_custom_call.1}
  #allocation0 [shape = 'u32[]', space=smem, size = 0x4, offset = 0x4, fixed_abs, tag = 'smem constant byte address 0x4 - core index']
  #allocation1 [shape = 'u32[144,128]{1,0:T(1,128)}', space=vmem, size = 0x12000, scoped, tag = 'internal scratch']
  %s0 = inlined_call_operand.hbm [shape: bf16[16,16], index: 0, kind: input, shape index: {}]
  %s1 = inlined_call_operand.hbm [shape: bf16[16,32], index: 1, kind: input, shape index: {}]
  %s2 = inlined_call_operand.vmem [shape: f32[1,32], index: 2, kind: input, shape index: {}]
  %s3 = inlined_call_operand.hbm [shape: bf16[32,128], index: 3, kind: input, shape index: {}]
  %s4 = inlined_call_operand.vmem [shape: f32[1,128], index: 4, kind: input, shape index: {}]
  %s5 = inlined_call_operand.vmem [shape: f32[1,128], index: 5, kind: input, shape index: {}]
  %s6 = inlined_call_operand.vmem [shape: f32[1,128], index: 6, kind: input, shape index: {}]
  %s7 = inlined_call_operand.hbm [shape: f32[16,128], index: 7, kind: output, shape index: {}]
  %s8 = sld [smem:[#allocation0]]
  $region50: #{tpu_custom_call.1} parent=0
    _
  %s10 = ssub.s32 1, %s8
  %s11 = scalar_select 0, %s10, %s8
  $region1: #{tpu_custom_call.1} parent=0
    #allocation2 [shape = 'u8[4096]{0}', space=vmem, size = 0x1000, scoped, tag = 'input window, operand 0, single buffered']
    #allocation3 [shape = 's32[1]{0}', space=sflag, size = 0x4, scoped, tag = 'scoped memory for tpu_custom_call.1']
    #allocation4 [shape = 's32[1]{0}', space=sflag, size = 0x4, scoped, tag = 'scoped memory for tpu_custom_call.1']
    #allocation5 [shape = 'u8[4096]{0}', space=vmem, size = 0x1000, scoped, tag = 'input window, operand 1, single buffered']
    #allocation6 [shape = 's32[1]{0}', space=sflag, size = 0x4, scoped, tag = 'scoped memory for tpu_custom_call.1']
    #allocation7 [shape = 'u8[8192]{0}', space=vmem, size = 0x2000, scoped, tag = 'input window, operand 3, single buffered']
    #allocation8 [shape = 'u8[8192]{0}', space=vmem, size = 0x2000, scoped, tag = 'output window, operand 0, single buffered']
    %12 = vsyncpa [#allocation3], 0
    %13 = vsyncpa [#allocation6], 0
    %14 = vsyncpa [#allocation4], 0
    // Predicated region
    $region2: #{tpu_custom_call.1} parent=1 // pred_check
      _
    $region3: #{tpu_custom_call.1} parent=1 // pred_check_branch
      %16 = sbr.rel (0) target = $region5
    $region4: #{tpu_custom_call.1} parent=1 // pred_region
      %s18 = ssub.s32 128, 128
      %19 = vsyncadd [#allocation3], %s18
      %s20 = sshll.u32 [#allocation2], 4
      %s21 = int_to_ptr.vmem [resolvable:$true] %s20
      %26 = dma.hbm_to_vmem [thread:$0]  %s0, 128, %s21, [#allocation3], 64, 64, 4
    $region5: #{tpu_custom_call.1} parent=1 // pred_fallthru
      _
    // Predicated region
    $region6: #{tpu_custom_call.1} parent=1 // pred_check
      _
    $region7: #{tpu_custom_call.1} parent=1 // pred_check_branch
      %28 = sbr.rel (0) target = $region9
    $region8: #{tpu_custom_call.1} parent=1 // pred_region
      %s30 = ssub.s32 128, 128
      %31 = vsyncadd [#allocation6], %s30
      %s32 = sshll.u32 [#allocation5], 4
      %s33 = int_to_ptr.vmem [resolvable:$true] %s32
      %38 = dma.hbm_to_vmem [thread:$0]  %s1, 128, %s33, [#allocation6], 64, 64, 4
    $region9: #{tpu_custom_call.1} parent=1 // pred_fallthru
      _
    // Predicated region
    $region10: #{tpu_custom_call.1} parent=1 // pred_check
      _
    $region11: #{tpu_custom_call.1} parent=1 // pred_check_branch
      %40 = sbr.rel (0) target = $region13
    $region12: #{tpu_custom_call.1} parent=1 // pred_region
      _
    $region13: #{tpu_custom_call.1} parent=1 // pred_fallthru
      _
    // Predicated region
    $region14: #{tpu_custom_call.1} parent=1 // pred_check
      _
    $region15: #{tpu_custom_call.1} parent=1 // pred_check_branch
      %42 = sbr.rel (0) target = $region17
    $region16: #{tpu_custom_call.1} parent=1 // pred_region
      %s44 = ssub.s32 256, 256
      %45 = vsyncadd [#allocation6], %s44
      %s46 = sshll.u32 [#allocation7], 4
      %s47 = int_to_ptr.vmem [resolvable:$true] %s46
      %52 = dma.hbm_to_vmem [thread:$0]  %s3, 256, %s47, [#allocation6], 64, 64, 4
    $region17: #{tpu_custom_call.1} parent=1 // pred_fallthru
      _
    // Predicated region
    $region18: #{tpu_custom_call.1} parent=1 // pred_check
      _
    $region19: #{tpu_custom_call.1} parent=1 // pred_check_branch
      %54 = sbr.rel (0) target = $region21
    $region20: #{tpu_custom_call.1} parent=1 // pred_region
      _
    $region21: #{tpu_custom_call.1} parent=1 // pred_fallthru
      _
    // Predicated region
    $region22: #{tpu_custom_call.1} parent=1 // pred_check
      _
    $region23: #{tpu_custom_call.1} parent=1 // pred_check_branch
      %56 = sbr.rel (0) target = $region25
    $region24: #{tpu_custom_call.1} parent=1 // pred_region
      _
    $region25: #{tpu_custom_call.1} parent=1 // pred_fallthru
      _
    // Predicated region
    $region26: #{tpu_custom_call.1} parent=1 // pred_check
      _
    $region27: #{tpu_custom_call.1} parent=1 // pred_check_branch
      %58 = sbr.rel (0) target = $region29
    $region28: #{tpu_custom_call.1} parent=1 // pred_region
      _
    $region29: #{tpu_custom_call.1} parent=1 // pred_fallthru
      _
    // Predicated region
    $region30: #{tpu_custom_call.1} parent=1 // pred_check
      _
    $region31: #{tpu_custom_call.1} parent=1 // pred_check_branch
      %60 = sbr.rel (0) target = $region33
    $region32: #{tpu_custom_call.1} parent=1 // pred_region
      %61 = dma.done [#allocation3], 128
    $region33: #{tpu_custom_call.1} parent=1 // pred_fallthru
      _
    // Predicated region
    $region34: #{tpu_custom_call.1} parent=1 // pred_check
      _
    $region35: #{tpu_custom_call.1} parent=1 // pred_check_branch
      %63 = sbr.rel (0) target = $region37
    $region36: #{tpu_custom_call.1} parent=1 // pred_region
      %64 = dma.done [#allocation6], 128
    $region37: #{tpu_custom_call.1} parent=1 // pred_fallthru
      _
    // Predicated region
    $region38: #{tpu_custom_call.1} parent=1 // pred_check
      _
    $region39: #{tpu_custom_call.1} parent=1 // pred_check_branch
      %66 = sbr.rel (0) target = $region41
    $region40: #{tpu_custom_call.1} parent=1 // pred_region
      %67 = dma.done [#allocation6], 256
    $region41: #{tpu_custom_call.1} parent=1 // pred_fallthru
      _
    %v69 = vld [vmem:[#allocation2] sm:$0xf]
    %v70 = vld [vmem:[#allocation2 + $0x4] sm:$0xf]
    %v71 = vld [vmem:[#allocation5] sm:$0xf]
    %v72 = vld [vmem:[#allocation5 + $0x4] sm:$0xf]
    %v73 = vld [vmem:[%s2] sm:$0x1]
    %v75 = vlaneseq
    %v76 = vshrl.u32 %v75, 7
    %v77 = vsub.s32 0, %v76
    %v78 = vrot.slane %v73, %v77
    %v82 = vunpack.c.l.b16 %v69
    %v83 = vunpack.c.l.b16 %v70
    %v84 = vpack.c.b16 %v83, %v82
    %v87 = vunpack.c.l.b16 %v71
    %v88 = vunpack.c.l.b16 %v72
    %v89 = vpack.c.b16 %v88, %v87
    %vm91 = vcmask 130048
    %v93 = vsel %vm91, %v84, 0
    %95 = vmatprep.subr.bf16.mxu0 0
    %96 = vmatpush1.bf16.msra.mxu0 0
    %97 = vmatprep.subr.bf16.mxu0 0
    %98 = vmatpush1.bf16.msra.mxu0 0
    %99 = vmatprep.subr.bf16.mxu0 0
    %100 = vmatpush1.bf16.msra.mxu0 0
    %101 = vmatprep.subr.bf16.mxu0 0
    %102 = vmatpush1.bf16.msra.mxu0 0
    %103 = vmatprep.subr.bf16.mxu0 0
    %104 = vmatpush1.bf16.msra.mxu0 0
    %105 = vmatprep.subr.bf16.mxu0 0
    %106 = vmatpush1.bf16.msra.mxu0 0
    %107 = vmatprep.subr.bf16.mxu0 0
    %108 = vmatpush1.bf16.msra.mxu0 0
    %109 = vmatprep.subr.bf16.mxu0 0
    %110 = vmatpush1.bf16.msra.mxu0 %v89
    %111 = vmatprep.subr.bf16.mxu0 0
    %112 = vmatpush2.bf16.msra.mxu0 0
    %113 = vmatprep.subr.bf16.mxu0 0
    %114 = vmatpush2.bf16.msra.mxu0 0
    %115 = vmatprep.subr.bf16.mxu0 0
    %116 = vmatpush2.bf16.msra.mxu0 0
    %117 = vmatprep.subr.bf16.mxu0 0
    %118 = vmatpush2.bf16.msra.mxu0 0
    %119 = vmatprep.subr.bf16.mxu0 0
    %120 = vmatpush2.bf16.msra.mxu0 0
    %121 = vmatprep.subr.bf16.mxu0 0
    %122 = vmatpush2.bf16.msra.mxu0 0
    %123 = vmatprep.subr.bf16.mxu0 0
    %124 = vmatpush2.bf16.msra.mxu0 0
    %125 = vmatprep.subr.bf16.mxu0 0
    %126 = vmatpush2.bf16.msra.mxu0 0
    %127 = vmatprep.mubr.bf16.mxu0 0
    %128 = vmatmul.mubr.bf16.gmra.mxu0 %v93
    %v129 = vpop.f32.mrf.mxu0
    %v130 = vadd.f32 %v78, %v129
    %v131 = vpop.f32.mrf.mxu0
    %v132 = vpop.f32.mrf.mxu0
    %v133 = vadd.f32 %v78, %v132
    %v134 = vpop.f32.mrf.mxu0
    %135 = vdwg.mxu0
    %v136 = vmax.f32 %v130, 0.0
    %v137 = vmax.f32 %v133, 0.0
    %v138 = vpack.c.bf16 %v137, %v136
    %v139 = vld [vmem:[#allocation7] sm:$0xf]
    %v140 = vld [vmem:[#allocation7 + $0x4] sm:$0xf]
    %v141 = vld [vmem:[#allocation7 + $0x8] sm:$0xf]
    %v142 = vld [vmem:[#allocation7 + $0xc] sm:$0xf]
    %v143 = vld [vmem:[%s4] sm:$0x1]
    %v145 = vlaneseq
    %v146 = vshrl.u32 %v145, 7
    %v147 = vsub.s32 0, %v146
    %v148 = vrot.slane %v143, %v147
    %v154 = vunpack.c.l.b16 %v139
    %v155 = vunpack.c.l.b16 %v140
    %v156 = vunpack.c.l.b16 %v141
    %v157 = vunpack.c.l.b16 %v142
    %v158 = vpack.c.b16 %v155, %v154
    %v159 = vpack.c.b16 %v157, %v156
    %vm162 = vcmask 261120
    %v164 = vsel %vm162, %v138, 0
    %166 = vmatprep.subr.bf16.mxu0 0
    %167 = vmatpush1.bf16.msra.mxu0 0
    %168 = vmatprep.subr.bf16.mxu0 0
    %169 = vmatpush1.bf16.msra.mxu0 0
    %170 = vmatprep.subr.bf16.mxu0 0
    %171 = vmatpush1.bf16.msra.mxu0 0
    %172 = vmatprep.subr.bf16.mxu0 0
    %173 = vmatpush1.bf16.msra.mxu0 0
    %174 = vmatprep.subr.bf16.mxu0 0
    %175 = vmatpush1.bf16.msra.mxu0 0
    %176 = vmatprep.subr.bf16.mxu0 0
    %177 = vmatpush1.bf16.msra.mxu0 0
    %178 = vmatprep.subr.bf16.mxu0 0
    %179 = vmatpush1.bf16.msra.mxu0 %v159
    %180 = vmatprep.subr.bf16.mxu0 0
    %181 = vmatpush1.bf16.msra.mxu0 %v158
    %182 = vmatprep.subr.bf16.mxu0 0
    %183 = vmatpush2.bf16.msra.mxu0 0
    %184 = vmatprep.subr.bf16.mxu0 0
    %185 = vmatpush2.bf16.msra.mxu0 0
    %186 = vmatprep.subr.bf16.mxu0 0
    %187 = vmatpush2.bf16.msra.mxu0 0
    %188 = vmatprep.subr.bf16.mxu0 0
    %189 = vmatpush2.bf16.msra.mxu0 0
    %190 = vmatprep.subr.bf16.mxu0 0
    %191 = vmatpush2.bf16.msra.mxu0 0
    %192 = vmatprep.subr.bf16.mxu0 0
    %193 = vmatpush2.bf16.msra.mxu0 0
    %194 = vmatprep.subr.bf16.mxu0 0
    %195 = vmatpush2.bf16.msra.mxu0 0
    %196 = vmatprep.subr.bf16.mxu0 0
    %197 = vmatpush2.bf16.msra.mxu0 0
    %198 = vmatprep.mubr.bf16.mxu0 0
    %199 = vmatmul.mubr.bf16.gmra.mxu0 %v164
    %v200 = vpop.f32.mrf.mxu0
    %v201 = vadd.f32 %v148, %v200
    %v202 = vpop.f32.mrf.mxu0
    %v203 = vpop.f32.mrf.mxu0
    %v204 = vadd.f32 %v148, %v203
    %v205 = vpop.f32.mrf.mxu0
    %206 = vdwg.mxu0
    %v207 = vld [vmem:[%s5] sm:$0x1]
    %v209 = vlaneseq
    %v210 = vshrl.u32 %v209, 7
    %v211 = vsub.s32 0, %v210
    %v212 = vrot.slane %v207, %v211
    %v214 = vadd.f32 %v201, %v212
    %v215 = vadd.f32 %v204, %v212
    %216 = vmax.xlane.f32.xlu0 %v214
    %v217 = vpop.xlane.xlu0 %216
    %218 = vmax.xlane.f32.xlu0 %v215
    %v219 = vpop.xlane.xlu0 %218
    %v220 = vsub.f32 %v214, %v217
    %v221 = vsub.f32 %v215, %v219
    %v222 = vmul.f32 %v220, 1.442695
    %v223 = vpow.pop %v222
    %v224 = vmul.f32 %v221, 1.442695
    %v225 = vpow.pop %v224
    %226 = vadd.xlane.f32.xlu0 %v223
    %v227 = vpop.xlane.xlu0 %226
    %228 = vadd.xlane.f32.xlu0 %v225
    %v229 = vpop.xlane.xlu0 %228
    %v230 = vlog2.pop %v227
    %v231 = vmul.f32 %v230, 0.6931472
    %v232 = vlog2.pop %v229
    %v233 = vmul.f32 %v232, 0.6931472
    %v234 = vadd.f32 %v217, %v231
    %v235 = vadd.f32 %v219, %v233
    %v236 = vld [vmem:[%s6] sm:$0x1]
    %v238 = vlaneseq
    %v239 = vshrl.u32 %v238, 7
    %v240 = vsub.s32 0, %v239
    %v241 = vrot.slane %v236, %v240
    %v243 = vmul.f32 %v234, %v241
    %v244 = vmul.f32 %v235, %v241
    %v245 = vsub.f32 %v201, %v243
    %v246 = vsub.f32 %v204, %v244
    %247 = vst [vmem:[#allocation8] sm:$0xff] %v245
    %248 = vst [vmem:[#allocation8 + $0x8] sm:$0xff] %v246
    // Predicated region
    $region42: #{tpu_custom_call.1} parent=1 // pred_check
      _
    $region43: #{tpu_custom_call.1} parent=1 // pred_check_branch
      %250 = sbr.rel (0) target = $region45
    $region44: #{tpu_custom_call.1} parent=1 // pred_region
      %s252 = ssub.s32 256, 256
      %253 = vsyncadd [#allocation4], %s252
      %s254 = sshll.u32 [#allocation8], 4
      %s255 = int_to_ptr.vmem [resolvable:$true] %s254
      %260 = dma.vmem_to_hbm [thread:$0]  %s255, 256, %s7, [#allocation4], 128, 128, 8
    $region45: #{tpu_custom_call.1} parent=1 // pred_fallthru
      _
    // Predicated region
    $region46: #{tpu_custom_call.1} parent=1 // pred_check
      _
    $region47: #{tpu_custom_call.1} parent=1 // pred_check_branch
      %262 = sbr.rel (0) target = $region49
    $region48: #{tpu_custom_call.1} parent=1 // pred_region
      %263 = dma.done [#allocation4], 256
    $region49: #{tpu_custom_call.1} parent=1 // pred_fallthru
      _
    %264 = vsyncpa [#allocation3], 1
    %265 = vsyncpa [#allocation6], 1
    %266 = vsyncpa [#allocation4], 1

</llo_original>
